<compile_context>
chip_gen: v6e
topology: v6e:2x2x1
jax: 0.10.0
libtpu: 0.0.40
codegen_flags: <defaults>
</compile_context>

<pallas_src>
import jax
import jax.numpy as jnp
from jax.experimental import pallas as pl
from jax.experimental.pallas import tpu as pltpu

LANE = 128


def _round_up(n, m=LANE):
    return ((n + m - 1) // m) * m


def actor_forward_kernel(x_ref,
                         w1_ref, b1_ref,
                         w2_ref, b2_ref,
                         wh_ref, bh_ref,
                         out_ref):
    # bf16 operands into the MXU, f32 accumulation / bias / ReLU on the VPU.
    x = x_ref[...].astype(jnp.bfloat16)

    # linear1 + relu
    h1 = jnp.dot(x, w1_ref[...], preferred_element_type=jnp.float32) + b1_ref[...]
    h1 = jnp.maximum(h1, 0.0).astype(jnp.bfloat16)

    # linear2 + relu
    h2 = jnp.dot(h1, w2_ref[...], preferred_element_type=jnp.float32) + b2_ref[...]
    h2 = jnp.maximum(h2, 0.0).astype(jnp.bfloat16)

    # fused mean/log_std head -> one lane-dense (B, 128) slab, one cast, one store
    out = jnp.dot(h2, wh_ref[...], preferred_element_type=jnp.float32) + bh_ref[...]
    out_ref[...] = out.astype(out_ref.dtype)

    # TODO(synk): Actor.sample() (exp(log_std) with LOG_STD_MIN/MAX clamp,
    # reparameterized Normal via pltpu.prng_seed/prng_random_bits, tanh squash,
    # log-prob correction) would be essentially free here (EUP slot is idle) and
    # is the biggest per-step rollout latency lever; kept host-side to preserve
    # the module's forward() contract.


def actor_forward(state, padded_params, n_actions, *,
                  out_dtype=jnp.float32,
                  num_tensorcores=1,
                  vmem_budget_bytes=None):
    """state: [B, state_dim] f32.  padded_params: fused + lane-padded bf16 weights.

    num_tensorcores: set to 2 on v7x to request an exact 2-way core-parallel
      split of the batch (one grid step per TensorCore).  Leave at 1 on
      single-TC chips (v5e/v6e), where a batch grid is a serial loop.
    vmem_budget_bytes: crossover between the single fully-resident block and the
      tiled batch grid.  Default 48 MiB stays under v7x's 64 MiB physical VMEM.
    """
    B, state_dim = state.shape
    w1, b1 = padded_params["w1"], padded_params["b1"]
    w2, b2 = padded_params["w2"], padded_params["b2"]
    wh, bh = padded_params["wh"], padded_params["bh"]
    h1p, h2p = w1.shape[1], w2.shape[1]
    head_out = wh.shape[1]  # 2*n_actions padded to a multiple of 128

    if vmem_budget_bytes is None:
        vmem_budget_bytes = 48 << 20

    # ---- footprint model (drives the tiling decision, per review) -----------
    weight_bytes = ((w1.size + w2.size + wh.size) * w1.dtype.itemsize
                    + (b1.size + b2.size + bh.size) * 4)
    out_itemsize = jnp.dtype(out_dtype).itemsize
    # per-row live bytes: state tile + output tile + f32 and bf16 activation copies
    row_bytes = (state_dim * state.dtype.itemsize
                 + head_out * out_itemsize
                 + (h1p + h2p) * (4 + 2))
    margin = 1 << 20

    args = (state, w1, b1, w2, b2, wh, bh)
    out_shape = jax.ShapeDtypeStruct((B, head_out), out_dtype)

    def _single_block(need_bytes):
        # Single grid point, everything VMEM-resident.  Only raise the scoped
        # VMEM limit when the default (16 MiB on v5e) would be too small.
        vmem_limit = None
        if need_bytes > (12 << 20):
            vmem_limit = int(min(2 * need_bytes, vmem_budget_bytes))
        full = pl.BlockSpec(memory_space=pltpu.VMEM)
        return pl.pallas_call(
            actor_forward_kernel,
            out_shape=out_shape,
            in_specs=[full] * 7,
            out_specs=full,
            compiler_params=pltpu.CompilerParams(vmem_limit_bytes=vmem_limit),
        )(*args)

    def _tiled(tile, dim_sem):
        # Weights stay resident (block index always (0, 0)); only state / output
        # blocks march over the batch axis.
        # TODO(synk): pipeline_mode=pl.Buffered(1) on the six constant-index
        # weight/bias specs would drop their redundant second pipeline buffer.
        resident = lambda a: pl.BlockSpec(a.shape, lambda i: (0, 0))
        return pl.pallas_call(
            actor_forward_kernel,
            out_shape=out_shape,
            grid=(B // tile,),
            in_specs=[
                pl.BlockSpec((tile, state_dim), lambda i: (i, 0)),
                resident(w1), resident(b1),
                resident(w2), resident(b2),
                resident(wh), resident(bh),
            ],
            out_specs=pl.BlockSpec((tile, head_out), lambda i: (i, 0)),
            compiler_params=pltpu.CompilerParams(dimension_semantics=dim_sem),
        )(*args)

    out = None

    # ---- v7x: exact N-way split, one grid step per TensorCore ---------------
    if num_tensorcores >= 2 and B % num_tensorcores == 0:
        tile = B // num_tensorcores
        if (tile % 8 == 0
                and weight_bytes + 2 * tile * row_bytes + margin <= vmem_budget_bytes):
            out = _tiled(tile, (pltpu.CORE_PARALLEL,))

    if out is None:
        need = weight_bytes + B * row_bytes + margin
        if need <= vmem_budget_bytes:
            # Best path on single-TC chips (v5e/v6e) and for small/latency-bound
            # batches anywhere: no per-step pipeline overhead, zero re-DMA.
            out = _single_block(need)
        else:
            # Batch too large for one block: tiled grid.  Prefer >=256-row tiles
            # (full MXU M dim on v6e/v7x); 128 and below only as fallback.
            for tile in (2048, 1024, 512, 256, 128, 64, 32, 16, 8):
                if (B % tile == 0
                        and weight_bytes + 2 * tile * row_bytes + margin
                        <= vmem_budget_bytes):
                    out = _tiled(tile, ("parallel",))
                    break
            if out is None:
                raise ValueError("no batch tile divides B and fits the VMEM budget")

    # For very large replay batches, consider out_dtype=jnp.bfloat16 and/or
    # consuming the fused slab directly instead of materializing these slices.
    mean = out[:, :n_actions]
    log_std = out[:, n_actions:2 * n_actions]
    return mean, log_std


def init_actor_params(key, state_dim, hidden_dim, n_actions):
    """Deterministic init mimicking nn.Linear default uniform(-1/sqrt(fan_in), ...).

    Returns (padded_params, raw_params):
      padded_params: transposed [in, out] weights with (a) mean/log_std heads fused
        into one [hidden, 2*n_actions] matrix, (b) hidden dims and head output
        zero-padded up to multiples of 128, (c) weight matrices cast to bfloat16
        (biases stay f32).  All done ONCE here, not per call.
      raw_params: unpadded/unfused f32 weights for the pure-JAX reference.
    """
    def linear(k, fan_in, fan_out):
        kw, kb = jax.random.split(k)
        bound = 1.0 / jnp.sqrt(jnp.float32(fan_in))
        w = jax.random.uniform(kw, (fan_in, fan_out), jnp.float32, -bound, bound)
        b = jax.random.uniform(kb, (1, fan_out), jnp.float32, -bound, bound)
        return w, b

    k1, k2, k3, k4 = jax.random.split(key, 4)
    w1, b1 = linear(k1, state_dim, hidden_dim[0])
    w2, b2 = linear(k2, hidden_dim[0], hidden_dim[1])
    wm, bm = linear(k3, hidden_dim[1], n_actions)
    ws, bs = linear(k4, hidden_dim[1], n_actions)

    # Fuse the two heads.
    wh = jnp.concatenate([wm, ws], axis=1)   # [hidden_dim[1], 2*n_actions]
    bh = jnp.concatenate([bm, bs], axis=1)   # [1, 2*n_actions]

    h1p = _round_up(hidden_dim[0])          # 300 -> 384
    h2p = _round_up(hidden_dim[1])          # 200 -> 256
    hop = _round_up(2 * n_actions)          # 8   -> 128

    def pad2(a, rows, cols):
        return jnp.pad(a, ((0, rows - a.shape[0]), (0, cols - a.shape[1])))

    padded = {
        "w1": pad2(w1, state_dim, h1p).astype(jnp.bfloat16), "b1": pad2(b1, 1, h1p),
        "w2": pad2(w2, h1p, h2p).astype(jnp.bfloat16),       "b2": pad2(b2, 1, h2p),
        "wh": pad2(wh, h2p, hop).astype(jnp.bfloat16),       "bh": pad2(bh, 1, hop),
    }
    raw = {"w1": w1, "b1": b1, "w2": w2, "b2": b2,
           "wm": wm, "bm": bm, "ws": ws, "bs": bs}
    return padded, raw


def actor_forward_ref(state, p, *, bf16_weights=True):
    """Pure-JAX reference.  bf16_weights=True mirrors the kernel's precision
    (bf16 MXU inputs, f32 accumulation); False is the exact f32 module."""
    def mm(x, w):
        if bf16_weights:
            return jnp.dot(x.astype(jnp.bfloat16), w.astype(jnp.bfloat16),
                           preferred_element_type=jnp.float32)
        return jnp.dot(x, w, preferred_element_type=jnp.float32)

    h1 = jnp.maximum(mm(state, p["w1"]) + p["b1"], 0.0)
    h2 = jnp.maximum(mm(h1, p["w2"]) + p["b2"], 0.0)
    return mm(h2, p["wm"]) + p["bm"], mm(h2, p["ws"]) + p["bs"]


def _check(mean, log_std, state, raw, n_actions):
    assert mean.shape == (state.shape[0], n_actions)
    assert log_std.shape == (state.shape[0], n_actions)
    # Matched-precision reference (tight) ...
    m_ref, s_ref = actor_forward_ref(state, raw, bf16_weights=True)
    assert jnp.allclose(mean, m_ref, atol=5e-3, rtol=5e-3)
    assert jnp.allclose(log_std, s_ref, atol=5e-3, rtol=5e-3)
    # ... and the exact f32 module (loose, bounds bf16 quantization error).
    m32, s32 = actor_forward_ref(state, raw, bf16_weights=False)
    assert jnp.allclose(mean, m32, atol=5e-2, rtol=5e-2)
    assert jnp.allclose(log_std, s32, atol=5e-2, rtol=5e-2)


if __name__ == "__main__":
    STATE_DIM = 16
    HIDDEN = (300, 200)
    N_ACTIONS = 4

    key = jax.random.PRNGKey(0)
    k_params, k_s, k_l = jax.random.split(key, 3)

    padded_params, raw_params = init_actor_params(k_params, STATE_DIM, HIDDEN, N_ACTIONS)

    # --- small, latency-bound rollout batch: single fully VMEM-resident block ---
    state_s = jax.random.normal(k_s, (8, STATE_DIM), dtype=jnp.float32)
    mean_s, log_std_s = actor_forward(state_s, padded_params, N_ACTIONS)
    jax.block_until_ready((mean_s, log_std_s))
    _check(mean_s, log_std_s, state_s, raw_params, N_ACTIONS)

    # --- replay batch: footprint (~4.5 MiB) still fits one block -> no grid,
    #     which is the right call on single-TC v5e/v6e ---
    state_l = jax.random.normal(k_l, (1024, STATE_DIM), dtype=jnp.float32)
    mean_l, log_std_l = actor_forward(state_l, padded_params, N_ACTIONS)
    jax.block_until_ready((mean_l, log_std_l))
    _check(mean_l, log_std_l, state_l, raw_params, N_ACTIONS)

    # --- exercise the tiled batch-grid fallback by forcing a tiny VMEM budget
    #     (picks a 256-row tile; on a v7x host one would instead pass
    #      num_tensorcores=2 for an exact core-parallel 2-way split) ---
    mean_t, log_std_t = actor_forward(state_l, padded_params, N_ACTIONS,
                                      vmem_budget_bytes=4 << 20)
    jax.block_until_ready((mean_t, log_std_t))
    _check(mean_t, log_std_t, state_l, raw_params, N_ACTIONS)

    print("KERNEL_OK")
</pallas_src>

<mosaic_0001>
module attributes {stable_mosaic.version = 11 : i64} {
  func.func @actor_forward_kernel(%arg0: memref<8x16xf32, #tpu.memory_space<vmem>>, %arg1: memref<16x384xbf16, #tpu.memory_space<vmem>>, %arg2: memref<1x384xf32, #tpu.memory_space<vmem>>, %arg3: memref<384x256xbf16, #tpu.memory_space<vmem>>, %arg4: memref<1x256xf32, #tpu.memory_space<vmem>>, %arg5: memref<256x128xbf16, #tpu.memory_space<vmem>>, %arg6: memref<1x128xf32, #tpu.memory_space<vmem>>, %arg7: memref<8x128xf32, #tpu.memory_space<vmem>>) attributes {dimension_semantics = [], scalar_prefetch = 0 : i64, scratch_operands = 0 : i64, tpu.core_type = #tpu.core_type<tc>} {
    %c0 = arith.constant 0 : index
    %c0_0 = arith.constant 0 : index
    %0 = vector.load %arg0[%c0, %c0_0] : memref<8x16xf32, #tpu.memory_space<vmem>>, vector<8x16xf32>
    %1 = arith.truncf %0 : vector<8x16xf32> to vector<8x16xbf16>
    %c0_1 = arith.constant 0 : index
    %c0_2 = arith.constant 0 : index
    %2 = vector.load %arg1[%c0_1, %c0_2] : memref<16x384xbf16, #tpu.memory_space<vmem>>, vector<16x384xbf16>
    %cst = arith.constant dense<0.000000e+00> : vector<8x384xf32>
    %3 = tpu.matmul %1, %2, %cst {dimension_numbers = #tpu.dot_dimension_numbers<[1], [0], [0], [1], [0, 0, 1, 1], [], []>} : vector<8x16xbf16>, vector<16x384xbf16>, vector<8x384xf32> -> vector<8x384xf32>
    %c0_3 = arith.constant 0 : index
    %c0_4 = arith.constant 0 : index
    %4 = vector.load %arg2[%c0_3, %c0_4] : memref<1x384xf32, #tpu.memory_space<vmem>>, vector<1x384xf32>
    %5 = vector.broadcast %4 : vector<1x384xf32> to vector<8x384xf32>
    %6 = arith.addf %3, %5 : vector<8x384xf32>
    %cst_5 = arith.constant 0.000000e+00 : f32
    %7 = vector.broadcast %cst_5 : f32 to vector<8x384xf32>
    %8 = arith.maximumf %6, %7 : vector<8x384xf32>
    %9 = arith.truncf %8 : vector<8x384xf32> to vector<8x384xbf16>
    %c0_6 = arith.constant 0 : index
    %c0_7 = arith.constant 0 : index
    %10 = vector.load %arg3[%c0_6, %c0_7] : memref<384x256xbf16, #tpu.memory_space<vmem>>, vector<384x256xbf16>
    %cst_8 = arith.constant dense<0.000000e+00> : vector<8x256xf32>
    %11 = tpu.matmul %9, %10, %cst_8 {dimension_numbers = #tpu.dot_dimension_numbers<[1], [0], [0], [1], [0, 0, 1, 1], [], []>} : vector<8x384xbf16>, vector<384x256xbf16>, vector<8x256xf32> -> vector<8x256xf32>
    %c0_9 = arith.constant 0 : index
    %c0_10 = arith.constant 0 : index
    %12 = vector.load %arg4[%c0_9, %c0_10] : memref<1x256xf32, #tpu.memory_space<vmem>>, vector<1x256xf32>
    %13 = vector.broadcast %12 : vector<1x256xf32> to vector<8x256xf32>
    %14 = arith.addf %11, %13 : vector<8x256xf32>
    %cst_11 = arith.constant 0.000000e+00 : f32
    %15 = vector.broadcast %cst_11 : f32 to vector<8x256xf32>
    %16 = arith.maximumf %14, %15 : vector<8x256xf32>
    %17 = arith.truncf %16 : vector<8x256xf32> to vector<8x256xbf16>
    %c0_12 = arith.constant 0 : index
    %c0_13 = arith.constant 0 : index
    %18 = vector.load %arg5[%c0_12, %c0_13] : memref<256x128xbf16, #tpu.memory_space<vmem>>, vector<256x128xbf16>
    %cst_14 = arith.constant dense<0.000000e+00> : vector<8x128xf32>
    %19 = tpu.matmul %17, %18, %cst_14 {dimension_numbers = #tpu.dot_dimension_numbers<[1], [0], [0], [1], [0, 0, 1, 1], [], []>} : vector<8x256xbf16>, vector<256x128xbf16>, vector<8x128xf32> -> vector<8x128xf32>
    %c0_15 = arith.constant 0 : index
    %c0_16 = arith.constant 0 : index
    %20 = vector.load %arg6[%c0_15, %c0_16] : memref<1x128xf32, #tpu.memory_space<vmem>>, vector<1x128xf32>
    %21 = vector.broadcast %20 : vector<1x128xf32> to vector<8x128xf32>
    %22 = arith.addf %19, %21 : vector<8x128xf32>
    %c0_17 = arith.constant 0 : index
    %c0_18 = arith.constant 0 : index
    %23 = vector.load %arg7[%c0_17, %c0_18] : memref<8x128xf32, #tpu.memory_space<vmem>>, vector<8x128xf32>
    tpu.vector_store %arg7[%c0_17, %c0_18], %22 {strides = array<i32>} : memref<8x128xf32, #tpu.memory_space<vmem>>, vector<8x128xf32>,
    return
  }
}

</mosaic_0001>

<llo_original>
// kernel: tpu_custom_call.1
$region0: #{tpu_custom_call.1}
  #allocation0 [shape = 'u32[]', space=smem, size = 0x4, offset = 0x4, fixed_abs, tag = 'smem constant byte address 0x4 - core index']
  #allocation1 [shape = 'u32[144,128]{1,0:T(1,128)}', space=vmem, size = 0x12000, scoped, tag = 'internal scratch']
  %s0 = inlined_call_operand.hbm [shape: f32[8,16], index: 0, kind: input, shape index: {}]
  %s1 = inlined_call_operand.hbm [shape: bf16[16,384], index: 1, kind: input, shape index: {}]
  %s2 = inlined_call_operand.vmem [shape: f32[1,384], index: 2, kind: input, shape index: {}]
  %s3 = inlined_call_operand.hbm [shape: bf16[384,256], index: 3, kind: input, shape index: {}]
  %s4 = inlined_call_operand.vmem [shape: f32[1,256], index: 4, kind: input, shape index: {}]
  %s5 = inlined_call_operand.hbm [shape: bf16[256,128], index: 5, kind: input, shape index: {}]
  %s6 = inlined_call_operand.vmem [shape: f32[1,128], index: 6, kind: input, shape index: {}]
  %s7 = inlined_call_operand.hbm [shape: f32[8,128], index: 7, kind: output, shape index: {}]
  %s8 = sld [smem:[#allocation0]]
  $region54: #{tpu_custom_call.1} parent=0
    _
  %s10 = ssub.s32 1, %s8
  %s11 = scalar_select 0, %s10, %s8
  $region1: #{tpu_custom_call.1} parent=0
    #allocation2 [shape = 'u8[4096]{0}', space=vmem, size = 0x1000, scoped, tag = 'input window, operand 0, single buffered']
    #allocation3 [shape = 's32[1]{0}', space=sflag, size = 0x4, scoped, tag = 'scoped memory for tpu_custom_call.1']
    #allocation4 [shape = 's32[1]{0}', space=sflag, size = 0x4, scoped, tag = 'scoped memory for tpu_custom_call.1']
    #allocation5 [shape = 'u8[12288]{0}', space=vmem, size = 0x3000, scoped, tag = 'input window, operand 1, single buffered']
    #allocation6 [shape = 's32[1]{0}', space=sflag, size = 0x4, scoped, tag = 'scoped memory for tpu_custom_call.1']
    #allocation7 [shape = 'u8[196608]{0}', space=vmem, size = 0x30000, scoped, tag = 'input window, operand 3, single buffered']
    #allocation8 [shape = 'u8[65536]{0}', space=vmem, size = 0x10000, scoped, tag = 'input window, operand 5, single buffered']
    #allocation9 [shape = 's32[1]{0}', space=sflag, size = 0x4, scoped, tag = 'scoped memory for tpu_custom_call.1']
    #allocation10 [shape = 'u8[4096]{0}', space=vmem, size = 0x1000, scoped, tag = 'output window, operand 0, single buffered']
    %12 = vsyncpa [#allocation3], 0
    %13 = vsyncpa [#allocation6], 0
    %14 = vsyncpa [#allocation9], 0
    %15 = vsyncpa [#allocation4], 0
    // Predicated region
    $region2: #{tpu_custom_call.1} parent=1 // pred_check
      _
    $region3: #{tpu_custom_call.1} parent=1 // pred_check_branch
      %17 = sbr.rel (0) target = $region5
    $region4: #{tpu_custom_call.1} parent=1 // pred_region
      %s19 = ssub.s32 128, 128
      %20 = vsyncadd [#allocation3], %s19
      %s22 = sshll.u32 [#allocation2], 4
      %s23 = int_to_ptr.vmem [resolvable:$true] %s22
      %25 = dma.hbm_to_vmem [thread:$0]  %s0, 128, %s23, [#allocation3]
    $region5: #{tpu_custom_call.1} parent=1 // pred_fallthru
      _
    // Predicated region
    $region6: #{tpu_custom_call.1} parent=1 // pred_check
      _
    $region7: #{tpu_custom_call.1} parent=1 // pred_check_branch
      %27 = sbr.rel (0) target = $region9
    $region8: #{tpu_custom_call.1} parent=1 // pred_region
      %s29 = ssub.s32 384, 384
      %30 = vsyncadd [#allocation6], %s29
      %s31 = sshll.u32 [#allocation5], 4
      %s32 = int_to_ptr.vmem [resolvable:$true] %s31
      %37 = dma.hbm_to_vmem [thread:$0]  %s1, 384, %s32, [#allocation6], 192, 192, 12
    $region9: #{tpu_custom_call.1} parent=1 // pred_fallthru
      _
    // Predicated region
    $region10: #{tpu_custom_call.1} parent=1 // pred_check
      _
    $region11: #{tpu_custom_call.1} parent=1 // pred_check_branch
      %39 = sbr.rel (0) target = $region13
    $region12: #{tpu_custom_call.1} parent=1 // pred_region
      _
    $region13: #{tpu_custom_call.1} parent=1 // pred_fallthru
      _
    // Predicated region
    $region14: #{tpu_custom_call.1} parent=1 // pred_check
      _
    $region15: #{tpu_custom_call.1} parent=1 // pred_check_branch
      %41 = sbr.rel (0) target = $region17
    $region16: #{tpu_custom_call.1} parent=1 // pred_region
      %s43 = ssub.s32 6144, 6144
      %44 = vsyncadd [#allocation6], %s43
      %s45 = sshll.u32 [#allocation7], 4
      %s46 = int_to_ptr.vmem [resolvable:$true] %s45
      %51 = dma.hbm_to_vmem [thread:$0]  %s3, 6144, %s46, [#allocation6], 128, 128, 8
    $region17: #{tpu_custom_call.1} parent=1 // pred_fallthru
      _
    // Predicated region
    $region18: #{tpu_custom_call.1} parent=1 // pred_check
      _
    $region19: #{tpu_custom_call.1} parent=1 // pred_check_branch
      %53 = sbr.rel (0) target = $region21
    $region20: #{tpu_custom_call.1} parent=1 // pred_region
      _
    $region21: #{tpu_custom_call.1} parent=1 // pred_fallthru
      _
    // Predicated region
    $region22: #{tpu_custom_call.1} parent=1 // pred_check
      _
    $region23: #{tpu_custom_call.1} parent=1 // pred_check_branch
      %55 = sbr.rel (0) target = $region25
    $region24: #{tpu_custom_call.1} parent=1 // pred_region
      %s57 = ssub.s32 2048, 2048
      %58 = vsyncadd [#allocation9], %s57
      %s59 = sshll.u32 [#allocation8], 4
      %s60 = int_to_ptr.vmem [resolvable:$true] %s59
      %65 = dma.hbm_to_vmem [thread:$0]  %s5, 2048, %s60, [#allocation9], 64, 64, 4
    $region25: #{tpu_custom_call.1} parent=1 // pred_fallthru
      _
    // Predicated region
    $region26: #{tpu_custom_call.1} parent=1 // pred_check
      _
    $region27: #{tpu_custom_call.1} parent=1 // pred_check_branch
      %67 = sbr.rel (0) target = $region29
    $region28: #{tpu_custom_call.1} parent=1 // pred_region
      _
    $region29: #{tpu_custom_call.1} parent=1 // pred_fallthru
      _
    // Predicated region
    $region30: #{tpu_custom_call.1} parent=1 // pred_check
      _
    $region31: #{tpu_custom_call.1} parent=1 // pred_check_branch
      %69 = sbr.rel (0) target = $region33
    $region32: #{tpu_custom_call.1} parent=1 // pred_region
      %70 = dma.done [#allocation3], 128
    $region33: #{tpu_custom_call.1} parent=1 // pred_fallthru
      _
    // Predicated region
    $region34: #{tpu_custom_call.1} parent=1 // pred_check
      _
    $region35: #{tpu_custom_call.1} parent=1 // pred_check_branch
      %72 = sbr.rel (0) target = $region37
    $region36: #{tpu_custom_call.1} parent=1 // pred_region
      %73 = dma.done [#allocation6], 384
    $region37: #{tpu_custom_call.1} parent=1 // pred_fallthru
      _
    // Predicated region
    $region38: #{tpu_custom_call.1} parent=1 // pred_check
      _
    $region39: #{tpu_custom_call.1} parent=1 // pred_check_branch
      %75 = sbr.rel (0) target = $region41
    $region40: #{tpu_custom_call.1} parent=1 // pred_region
      %76 = dma.done [#allocation6], 6144
    $region41: #{tpu_custom_call.1} parent=1 // pred_fallthru
      _
    // Predicated region
    $region42: #{tpu_custom_call.1} parent=1 // pred_check
      _
    $region43: #{tpu_custom_call.1} parent=1 // pred_check_branch
      %78 = sbr.rel (0) target = $region45
    $region44: #{tpu_custom_call.1} parent=1 // pred_region
      %79 = dma.done [#allocation9], 2048
    $region45: #{tpu_custom_call.1} parent=1 // pred_fallthru
      _
    %v81 = vld [vmem:[#allocation2] sm:$0xff]
    %v82 = vpack.c.bf16 %v81, %v81
    %v83 = vld [vmem:[#allocation5] sm:$0xff]
    %v84 = vld [vmem:[#allocation5 + $0x8] sm:$0xf]
    %v85 = vld [vmem:[#allocation5 + $0xc] sm:$0xff]
    %v86 = vld [vmem:[#allocation5 + $0x14] sm:$0xf]
    %v87 = vld [vmem:[%s2] sm:$0x7]
    %v89 = vlaneseq
    %v90 = vshrl.u32 %v89, 7
    %v91 = vsub.s32 0, %v90
    %v92 = vrot.slane %v87, %v91
    %v93 = vlaneseq
    %v94 = vshrl.u32 %v93, 7
    %v95 = vsub.s32 1, %v94
    %v96 = vrot.slane %v87, %v95
    %v97 = vlaneseq
    %v98 = vshrl.u32 %v97, 7
    %v99 = vsub.s32 2, %v98
    %v100 = vrot.slane %v87, %v99
    %v108 = vunpack.c.l.b16 %v83
    %v109 = vunpack.c.h.b16 %v83
    %v110 = vunpack.c.l.b16 %v84
    %v111 = vunpack.c.l.b16 %v85
    %v112 = vunpack.c.h.b16 %v85
    %v113 = vunpack.c.l.b16 %v86
    %v114 = vpack.c.b16 %v111, %v108
    %v115 = vpack.c.b16 %v112, %v109
    %v116 = vpack.c.b16 %v113, %v110
    %vm120 = vcmask 130048
    %v122 = vsel %vm120, %v82, 0
    %124 = vmatprep.subr.bf16.mxu0 0
    %125 = vmatpush1.bf16.msra.mxu0 0
    %126 = vmatprep.subr.bf16.mxu0 0
    %127 = vmatpush1.bf16.msra.mxu0 0
    %128 = vmatprep.subr.bf16.mxu0 0
    %129 = vmatpush1.bf16.msra.mxu0 0
    %130 = vmatprep.subr.bf16.mxu0 0
    %131 = vmatpush1.bf16.msra.mxu0 0
    %132 = vmatprep.subr.bf16.mxu0 0
    %133 = vmatpush1.bf16.msra.mxu0 0
    %134 = vmatprep.subr.bf16.mxu0 0
    %135 = vmatpush1.bf16.msra.mxu0 0
    %136 = vmatprep.subr.bf16.mxu0 0
    %137 = vmatpush1.bf16.msra.mxu0 0
    %138 = vmatprep.subr.bf16.mxu0 %v115
    %139 = vmatpush1.bf16.msra.mxu0 %v114
    %140 = vmatprep.subr.bf16.mxu0 0
    %141 = vmatpush2.bf16.msra.mxu0 0
    %142 = vmatprep.subr.bf16.mxu0 0
    %143 = vmatpush2.bf16.msra.mxu0 0
    %144 = vmatprep.subr.bf16.mxu0 0
    %145 = vmatpush2.bf16.msra.mxu0 0
    %146 = vmatprep.subr.bf16.mxu0 0
    %147 = vmatpush2.bf16.msra.mxu0 0
    %148 = vmatprep.subr.bf16.mxu0 0
    %149 = vmatpush2.bf16.msra.mxu0 0
    %150 = vmatprep.subr.bf16.mxu0 0
    %151 = vmatpush2.bf16.msra.mxu0 0
    %152 = vmatprep.subr.bf16.mxu0 0
    %153 = vmatpush2.bf16.msra.mxu0 0
    %154 = vmatprep.subr.bf16.mxu0 0
    %155 = vmatpush2.bf16.msra.mxu0 0
    %156 = vmatprep.mubr.bf16.mxu0 0
    %157 = vmatmul.mubr.bf16.gmra.mxu0 %v122
    %v158 = vpop.f32.mrf.mxu0
    %v159 = vadd.f32 %v92, %v158
    %v160 = vpop.f32.mrf.mxu0
    %v161 = vadd.f32 %v96, %v160
    %v162 = vpop.f32.mrf.mxu0
    %v163 = vpop.f32.mrf.mxu0
    %164 = vdwg.mxu0
    %165 = vmatprep.subr.bf16.mxu0 0
    %166 = vmatpush1.bf16.msra.mxu0 0
    %167 = vmatprep.subr.bf16.mxu0 0
    %168 = vmatpush1.bf16.msra.mxu0 0
    %169 = vmatprep.subr.bf16.mxu0 0
    %170 = vmatpush1.bf16.msra.mxu0 0
    %171 = vmatprep.subr.bf16.mxu0 0
    %172 = vmatpush1.bf16.msra.mxu0 0
    %173 = vmatprep.subr.bf16.mxu0 0
    %174 = vmatpush1.bf16.msra.mxu0 0
    %175 = vmatprep.subr.bf16.mxu0 0
    %176 = vmatpush1.bf16.msra.mxu0 0
    %177 = vmatprep.subr.bf16.mxu0 0
    %178 = vmatpush1.bf16.msra.mxu0 0
    %179 = vmatprep.subr.bf16.mxu0 0
    %180 = vmatpush1.bf16.msra.mxu0 %v116
    %181 = vmatprep.subr.bf16.mxu0 0
    %182 = vmatpush2.bf16.msra.mxu0 0
    %183 = vmatprep.subr.bf16.mxu0 0
    %184 = vmatpush2.bf16.msra.mxu0 0
    %185 = vmatprep.subr.bf16.mxu0 0
    %186 = vmatpush2.bf16.msra.mxu0 0
    %187 = vmatprep.subr.bf16.mxu0 0
    %188 = vmatpush2.bf16.msra.mxu0 0
    %189 = vmatprep.subr.bf16.mxu0 0
    %190 = vmatpush2.bf16.msra.mxu0 0
    %191 = vmatprep.subr.bf16.mxu0 0
    %192 = vmatpush2.bf16.msra.mxu0 0
    %193 = vmatprep.subr.bf16.mxu0 0
    %194 = vmatpush2.bf16.msra.mxu0 0
    %195 = vmatprep.subr.bf16.mxu0 0
    %196 = vmatpush2.bf16.msra.mxu0 0
    %197 = vmatprep.mubr.bf16.mxu0 0
    %198 = vmatmul.mubr.bf16.gmra.mxu0 %v122
    %v199 = vpop.f32.mrf.mxu0
    %v200 = vadd.f32 %v100, %v199
    %v201 = vpop.f32.mrf.mxu0
    %v202 = vpop.f32.mrf.mxu0
    %v203 = vpop.f32.mrf.mxu0
    %204 = vdwg.mxu0
    %v205 = vmax.f32 %v159, 0.0
    %v206 = vmax.f32 %v161, 0.0
    %v207 = vmax.f32 %v200, 0.0
    %v208 = vpack.c.bf16 %v205, %v205
    %v209 = vpack.c.bf16 %v206, %v206
    %v210 = vpack.c.bf16 %v207, %v207
    %v211 = vld [vmem:[#allocation7] sm:$0xff]
    %v212 = vld [vmem:[#allocation7 + $0x8] sm:$0xff]
    %v213 = vld [vmem:[#allocation7 + $0x10] sm:$0xff]
    %v214 = vld [vmem:[#allocation7 + $0x18] sm:$0xff]
    %v215 = vld [vmem:[#allocation7 + $0x20] sm:$0xff]
    %v216 = vld [vmem:[#allocation7 + $0x28] sm:$0xff]
    %v217 = vld [vmem:[#allocation7 + $0x30] sm:$0xff]
    %v218 = vld [vmem:[#allocation7 + $0x38] sm:$0xff]
    %v219 = vld [vmem:[#allocation7 + $0x40] sm:$0xff]
    %v220 = vld [vmem:[#allocation7 + $0x48] sm:$0xff]
    %v221 = vld [vmem:[#allocation7 + $0x50] sm:$0xff]
    %v222 = vld [vmem:[#allocation7 + $0x58] sm:$0xff]
    %v223 = vld [vmem:[#allocation7 + $0x60] sm:$0xff]
    %v224 = vld [vmem:[#allocation7 + $0x68] sm:$0xff]
    %v225 = vld [vmem:[#allocation7 + $0x70] sm:$0xff]
    %v226 = vld [vmem:[#allocation7 + $0x78] sm:$0xff]
    %v227 = vld [vmem:[#allocation7 + $0x80] sm:$0xff]
    %v228 = vld [vmem:[#allocation7 + $0x88] sm:$0xff]
    %v229 = vld [vmem:[#allocation7 + $0x90] sm:$0xff]
    %v230 = vld [vmem:[#allocation7 + $0x98] sm:$0xff]
    %v231 = vld [vmem:[#allocation7 + $0xa0] sm:$0xff]
    %v232 = vld [vmem:[#allocation7 + $0xa8] sm:$0xff]
    %v233 = vld [vmem:[#allocation7 + $0xb0] sm:$0xff]
    %v234 = vld [vmem:[#allocation7 + $0xb8] sm:$0xff]
    %v235 = vld [vmem:[#allocation7 + $0xc0] sm:$0xff]
    %v236 = vld [vmem:[#allocation7 + $0xc8] sm:$0xff]
    %v237 = vld [vmem:[#allocation7 + $0xd0] sm:$0xff]
    %v238 = vld [vmem:[#allocation7 + $0xd8] sm:$0xff]
    %v239 = vld [vmem:[#allocation7 + $0xe0] sm:$0xff]
    %v240 = vld [vmem:[#allocation7 + $0xe8] sm:$0xff]
    %v241 = vld [vmem:[#allocation7 + $0xf0] sm:$0xff]
    %v242 = vld [vmem:[#allocation7 + $0xf8] sm:$0xff]
    %v243 = vld [vmem:[#allocation7 + $0x100] sm:$0xff]
    %v244 = vld [vmem:[#allocation7 + $0x108] sm:$0xff]
    %v245 = vld [vmem:[#allocation7 + $0x110] sm:$0xff]
    %v246 = vld [vmem:[#allocation7 + $0x118] sm:$0xff]
    %v247 = vld [vmem:[#allocation7 + $0x120] sm:$0xff]
    %v248 = vld [vmem:[#allocation7 + $0x128] sm:$0xff]
    %v249 = vld [vmem:[#allocation7 + $0x130] sm:$0xff]
    %v250 = vld [vmem:[#allocation7 + $0x138] sm:$0xff]
    %v251 = vld [vmem:[#allocation7 + $0x140] sm:$0xff]
    %v252 = vld [vmem:[#allocation7 + $0x148] sm:$0xff]
    %v253 = vld [vmem:[#allocation7 + $0x150] sm:$0xff]
    %v254 = vld [vmem:[#allocation7 + $0x158] sm:$0xff]
    %v255 = vld [vmem:[#allocation7 + $0x160] sm:$0xff]
    %v256 = vld [vmem:[#allocation7 + $0x168] sm:$0xff]
    %v257 = vld [vmem:[#allocation7 + $0x170] sm:$0xff]
    %v258 = vld [vmem:[#allocation7 + $0x178] sm:$0xff]
    %v259 = vld [vmem:[%s4] sm:$0x3]
    %v261 = vlaneseq
    %v262 = vshrl.u32 %v261, 7
    %v263 = vsub.s32 0, %v262
    %v264 = vrot.slane %v259, %v263
    %v265 = vlaneseq
    %v266 = vshrl.u32 %v265, 7
    %v267 = vsub.s32 1, %v266
    %v268 = vrot.slane %v259, %v267
    %v319 = vunpack.c.l.b16 %v211
    %v320 = vunpack.c.h.b16 %v211
    %v321 = vunpack.c.l.b16 %v212
    %v322 = vunpack.c.h.b16 %v212
    %v323 = vunpack.c.l.b16 %v213
    %v324 = vunpack.c.h.b16 %v213
    %v325 = vunpack.c.l.b16 %v214
    %v326 = vunpack.c.h.b16 %v214
    %v327 = vunpack.c.l.b16 %v215
    %v328 = vunpack.c.h.b16 %v215
    %v329 = vunpack.c.l.b16 %v216
    %v330 = vunpack.c.h.b16 %v216
    %v331 = vunpack.c.l.b16 %v217
    %v332 = vunpack.c.h.b16 %v217
    %v333 = vunpack.c.l.b16 %v218
    %v334 = vunpack.c.h.b16 %v218
    %v335 = vunpack.c.l.b16 %v219
    %v336 = vunpack.c.h.b16 %v219
    %v337 = vunpack.c.l.b16 %v220
    %v338 = vunpack.c.h.b16 %v220
    %v339 = vunpack.c.l.b16 %v221
    %v340 = vunpack.c.h.b16 %v221
    %v341 = vunpack.c.l.b16 %v222
    %v342 = vunpack.c.h.b16 %v222
    %v343 = vunpack.c.l.b16 %v223
    %v344 = vunpack.c.h.b16 %v223
    %v345 = vunpack.c.l.b16 %v224
    %v346 = vunpack.c.h.b16 %v224
    %v347 = vunpack.c.l.b16 %v225
    %v348 = vunpack.c.h.b16 %v225
    %v349 = vunpack.c.l.b16 %v226
    %v350 = vunpack.c.h.b16 %v226
    %v351 = vunpack.c.l.b16 %v227
    %v352 = vunpack.c.h.b16 %v227
    %v353 = vunpack.c.l.b16 %v228
    %v354 = vunpack.c.h.b16 %v228
    %v355 = vunpack.c.l.b16 %v229
    %v356 = vunpack.c.h.b16 %v229
    %v357 = vunpack.c.l.b16 %v230
    %v358 = vunpack.c.h.b16 %v230
    %v359 = vunpack.c.l.b16 %v231
    %v360 = vunpack.c.h.b16 %v231
    %v361 = vunpack.c.l.b16 %v232
    %v362 = vunpack.c.h.b16 %v232
    %v363 = vunpack.c.l.b16 %v233
    %v364 = vunpack.c.h.b16 %v233
    %v365 = vunpack.c.l.b16 %v234
    %v366 = vunpack.c.h.b16 %v234
    %v367 = vunpack.c.l.b16 %v235
    %v368 = vunpack.c.h.b16 %v235
    %v369 = vunpack.c.l.b16 %v236
    %v370 = vunpack.c.h.b16 %v236
    %v371 = vunpack.c.l.b16 %v237
    %v372 = vunpack.c.h.b16 %v237
    %v373 = vunpack.c.l.b16 %v238
    %v374 = vunpack.c.h.b16 %v238
    %v375 = vunpack.c.l.b16 %v239
    %v376 = vunpack.c.h.b16 %v239
    %v377 = vunpack.c.l.b16 %v240
    %v378 = vunpack.c.h.b16 %v240
    %v379 = vunpack.c.l.b16 %v241
    %v380 = vunpack.c.h.b16 %v241
    %v381 = vunpack.c.l.b16 %v242
    %v382 = vunpack.c.h.b16 %v242
    %v383 = vunpack.c.l.b16 %v243
    %v384 = vunpack.c.h.b16 %v243
    %v385 = vunpack.c.l.b16 %v244
    %v386 = vunpack.c.h.b16 %v244
    %v387 = vunpack.c.l.b16 %v245
    %v388 = vunpack.c.h.b16 %v245
    %v389 = vunpack.c.l.b16 %v246
    %v390 = vunpack.c.h.b16 %v246
    %v391 = vunpack.c.l.b16 %v247
    %v392 = vunpack.c.h.b16 %v247
    %v393 = vunpack.c.l.b16 %v248
    %v394 = vunpack.c.h.b16 %v248
    %v395 = vunpack.c.l.b16 %v249
    %v396 = vunpack.c.h.b16 %v249
    %v397 = vunpack.c.l.b16 %v250
    %v398 = vunpack.c.h.b16 %v250
    %v399 = vunpack.c.l.b16 %v251
    %v400 = vunpack.c.h.b16 %v251
    %v401 = vunpack.c.l.b16 %v252
    %v402 = vunpack.c.h.b16 %v252
    %v403 = vunpack.c.l.b16 %v253
    %v404 = vunpack.c.h.b16 %v253
    %v405 = vunpack.c.l.b16 %v254
    %v406 = vunpack.c.h.b16 %v254
    %v407 = vunpack.c.l.b16 %v255
    %v408 = vunpack.c.h.b16 %v255
    %v409 = vunpack.c.l.b16 %v256
    %v410 = vunpack.c.h.b16 %v256
    %v411 = vunpack.c.l.b16 %v257
    %v412 = vunpack.c.h.b16 %v257
    %v413 = vunpack.c.l.b16 %v258
    %v414 = vunpack.c.h.b16 %v258
    %v415 = vpack.c.b16 %v321, %v319
    %v416 = vpack.c.b16 %v322, %v320
    %v417 = vpack.c.b16 %v325, %v323
    %v418 = vpack.c.b16 %v326, %v324
    %v419 = vpack.c.b16 %v329, %v327
    %v420 = vpack.c.b16 %v330, %v328
    %v421 = vpack.c.b16 %v333, %v331
    %v422 = vpack.c.b16 %v334, %v332
    %v423 = vpack.c.b16 %v337, %v335
    %v424 = vpack.c.b16 %v338, %v336
    %v425 = vpack.c.b16 %v341, %v339
    %v426 = vpack.c.b16 %v342, %v340
    %v427 = vpack.c.b16 %v345, %v343
    %v428 = vpack.c.b16 %v346, %v344
    %v429 = vpack.c.b16 %v349, %v347
    %v430 = vpack.c.b16 %v350, %v348
    %v431 = vpack.c.b16 %v353, %v351
    %v432 = vpack.c.b16 %v354, %v352
    %v433 = vpack.c.b16 %v357, %v355
    %v434 = vpack.c.b16 %v358, %v356
    %v435 = vpack.c.b16 %v361, %v359
    %v436 = vpack.c.b16 %v362, %v360
    %v437 = vpack.c.b16 %v365, %v363
    %v438 = vpack.c.b16 %v366, %v364
    %v439 = vpack.c.b16 %v369, %v367
    %v440 = vpack.c.b16 %v370, %v368
    %v441 = vpack.c.b16 %v373, %v371
    %v442 = vpack.c.b16 %v374, %v372
    %v443 = vpack.c.b16 %v377, %v375
    %v444 = vpack.c.b16 %v378, %v376
    %v445 = vpack.c.b16 %v381, %v379
    %v446 = vpack.c.b16 %v382, %v380
    %v447 = vpack.c.b16 %v385, %v383
    %v448 = vpack.c.b16 %v386, %v384
    %v449 = vpack.c.b16 %v389, %v387
    %v450 = vpack.c.b16 %v390, %v388
    %v451 = vpack.c.b16 %v393, %v391
    %v452 = vpack.c.b16 %v394, %v392
    %v453 = vpack.c.b16 %v397, %v395
    %v454 = vpack.c.b16 %v398, %v396
    %v455 = vpack.c.b16 %v401, %v399
    %v456 = vpack.c.b16 %v402, %v400
    %v457 = vpack.c.b16 %v405, %v403
    %v458 = vpack.c.b16 %v406, %v404
    %v459 = vpack.c.b16 %v409, %v407
    %v460 = vpack.c.b16 %v410, %v408
    %v461 = vpack.c.b16 %v413, %v411
    %v462 = vpack.c.b16 %v414, %v412
    %511 = vmatprep.subr.bf16.mxu0 %v430
    %512 = vmatpush1.bf16.msra.mxu0 %v429
    %513 = vmatprep.subr.bf16.mxu0 %v428
    %514 = vmatpush1.bf16.msra.mxu0 %v427
    %515 = vmatprep.subr.bf16.mxu0 %v426
    %516 = vmatpush1.bf16.msra.mxu0 %v425
    %517 = vmatprep.subr.bf16.mxu0 %v424
    %518 = vmatpush1.bf16.msra.mxu0 %v423
    %519 = vmatprep.subr.bf16.mxu0 %v422
    %520 = vmatpush1.bf16.msra.mxu0 %v421
    %521 = vmatprep.subr.bf16.mxu0 %v420
    %522 = vmatpush1.bf16.msra.mxu0 %v419
    %523 = vmatprep.subr.bf16.mxu0 %v418
    %524 = vmatpush1.bf16.msra.mxu0 %v417
    %525 = vmatprep.subr.bf16.mxu0 %v416
    %526 = vmatpush1.bf16.msra.mxu0 %v415
    %527 = vmatprep.subr.bf16.mxu0 %v446
    %528 = vmatpush2.bf16.msra.mxu0 %v445
    %529 = vmatprep.subr.bf16.mxu0 %v444
    %530 = vmatpush2.bf16.msra.mxu0 %v443
    %531 = vmatprep.subr.bf16.mxu0 %v442
    %532 = vmatpush2.bf16.msra.mxu0 %v441
    %533 = vmatprep.subr.bf16.mxu0 %v440
    %534 = vmatpush2.bf16.msra.mxu0 %v439
    %535 = vmatprep.subr.bf16.mxu0 %v438
    %536 = vmatpush2.bf16.msra.mxu0 %v437
    %537 = vmatprep.subr.bf16.mxu0 %v436
    %538 = vmatpush2.bf16.msra.mxu0 %v435
    %539 = vmatprep.subr.bf16.mxu0 %v434
    %540 = vmatpush2.bf16.msra.mxu0 %v433
    %541 = vmatprep.subr.bf16.mxu0 %v432
    %542 = vmatpush2.bf16.msra.mxu0 %v431
    %543 = vmatprep.mubr.bf16.mxu0 %v209
    %544 = vmatmul.mubr.bf16.gmra.mxu0 %v208
    %v545 = vpop.f32.mrf.mxu0
    %v546 = vadd.f32 %v264, %v545
    %v547 = vpop.f32.mrf.mxu0
    %v548 = vadd.f32 %v268, %v547
    %v549 = vpop.f32.mrf.mxu0
    %v550 = vpop.f32.mrf.mxu0
    %551 = vdwg.mxu0
    %552 = vmatprep.subr.bf16.mxu0 %v462
    %553 = vmatpush1.bf16.msra.mxu0 %v461
    %554 = vmatprep.subr.bf16.mxu0 %v460
    %555 = vmatpush1.bf16.msra.mxu0 %v459
    %556 = vmatprep.subr.bf16.mxu0 %v458
    %557 = vmatpush1.bf16.msra.mxu0 %v457
    %558 = vmatprep.subr.bf16.mxu0 %v456
    %559 = vmatpush1.bf16.msra.mxu0 %v455
    %560 = vmatprep.subr.bf16.mxu0 %v454
    %561 = vmatpush1.bf16.msra.mxu0 %v453
    %562 = vmatprep.subr.bf16.mxu0 %v452
    %563 = vmatpush1.bf16.msra.mxu0 %v451
    %564 = vmatprep.subr.bf16.mxu0 %v450
    %565 = vmatpush1.bf16.msra.mxu0 %v449
    %566 = vmatprep.subr.bf16.mxu0 %v448
    %567 = vmatpush1.bf16.msra.mxu0 %v447
    %568 = vmatprep.subr.bf16.mxu0 0
    %569 = vmatpush2.bf16.msra.mxu0 0
    %570 = vmatprep.subr.bf16.mxu0 0
    %571 = vmatpush2.bf16.msra.mxu0 0
    %572 = vmatprep.subr.bf16.mxu0 0
    %573 = vmatpush2.bf16.msra.mxu0 0
    %574 = vmatprep.subr.bf16.mxu0 0
    %575 = vmatpush2.bf16.msra.mxu0 0
    %576 = vmatprep.subr.bf16.mxu0 0
    %577 = vmatpush2.bf16.msra.mxu0 0
    %578 = vmatprep.subr.bf16.mxu0 0
    %579 = vmatpush2.bf16.msra.mxu0 0
    %580 = vmatprep.subr.bf16.mxu0 0
    %581 = vmatpush2.bf16.msra.mxu0 0
    %582 = vmatprep.subr.bf16.mxu0 0
    %583 = vmatpush2.bf16.msra.mxu0 0
    %584 = vmatprep.mubr.bf16.mxu0 0
    %585 = vmatmul.mubr.bf16.gmra.mxu0 %v210
    %v586 = vpop.f32.mrf.mxu0
    %v587 = vadd.f32 %v546, %v586
    %v588 = vpop.f32.mrf.mxu0
    %v589 = vadd.f32 %v548, %v588
    %v590 = vpop.f32.mrf.mxu0
    %v591 = vpop.f32.mrf.mxu0
    %592 = vdwg.mxu0
    %v593 = vmax.f32 %v587, 0.0
    %v594 = vmax.f32 %v589, 0.0
    %v595 = vpack.c.bf16 %v593, %v593
    %v596 = vpack.c.bf16 %v594, %v594
    %v597 = vld [vmem:[#allocation8] sm:$0xf]
    %v598 = vld [vmem:[#allocation8 + $0x4] sm:$0xf]
    %v599 = vld [vmem:[#allocation8 + $0x8] sm:$0xf]
    %v600 = vld [vmem:[#allocation8 + $0xc] sm:$0xf]
    %v601 = vld [vmem:[#allocation8 + $0x10] sm:$0xf]
    %v602 = vld [vmem:[#allocation8 + $0x14] sm:$0xf]
    %v603 = vld [vmem:[#allocation8 + $0x18] sm:$0xf]
    %v604 = vld [vmem:[#allocation8 + $0x1c] sm:$0xf]
    %v605 = vld [vmem:[#allocation8 + $0x20] sm:$0xf]
    %v606 = vld [vmem:[#allocation8 + $0x24] sm:$0xf]
    %v607 = vld [vmem:[#allocation8 + $0x28] sm:$0xf]
    %v608 = vld [vmem:[#allocation8 + $0x2c] sm:$0xf]
    %v609 = vld [vmem:[#allocation8 + $0x30] sm:$0xf]
    %v610 = vld [vmem:[#allocation8 + $0x34] sm:$0xf]
    %v611 = vld [vmem:[#allocation8 + $0x38] sm:$0xf]
    %v612 = vld [vmem:[#allocation8 + $0x3c] sm:$0xf]
    %v613 = vld [vmem:[#allocation8 + $0x40] sm:$0xf]
    %v614 = vld [vmem:[#allocation8 + $0x44] sm:$0xf]
    %v615 = vld [vmem:[#allocation8 + $0x48] sm:$0xf]
    %v616 = vld [vmem:[#allocation8 + $0x4c] sm:$0xf]
    %v617 = vld [vmem:[#allocation8 + $0x50] sm:$0xf]
    %v618 = vld [vmem:[#allocation8 + $0x54] sm:$0xf]
    %v619 = vld [vmem:[#allocation8 + $0x58] sm:$0xf]
    %v620 = vld [vmem:[#allocation8 + $0x5c] sm:$0xf]
    %v621 = vld [vmem:[#allocation8 + $0x60] sm:$0xf]
    %v622 = vld [vmem:[#allocation8 + $0x64] sm:$0xf]
    %v623 = vld [vmem:[#allocation8 + $0x68] sm:$0xf]
    %v624 = vld [vmem:[#allocation8 + $0x6c] sm:$0xf]
    %v625 = vld [vmem:[#allocation8 + $0x70] sm:$0xf]
    %v626 = vld [vmem:[#allocation8 + $0x74] sm:$0xf]
    %v627 = vld [vmem:[#allocation8 + $0x78] sm:$0xf]
    %v628 = vld [vmem:[#allocation8 + $0x7c] sm:$0xf]
    %v629 = vld [vmem:[%s6] sm:$0x1]
    %v631 = vlaneseq
    %v632 = vshrl.u32 %v631, 7
    %v633 = vsub.s32 0, %v632
    %v634 = vrot.slane %v629, %v633
    %v668 = vunpack.c.l.b16 %v597
    %v669 = vunpack.c.l.b16 %v598
    %v670 = vunpack.c.l.b16 %v599
    %v671 = vunpack.c.l.b16 %v600
    %v672 = vunpack.c.l.b16 %v601
    %v673 = vunpack.c.l.b16 %v602
    %v674 = vunpack.c.l.b16 %v603
    %v675 = vunpack.c.l.b16 %v604
    %v676 = vunpack.c.l.b16 %v605
    %v677 = vunpack.c.l.b16 %v606
    %v678 = vunpack.c.l.b16 %v607
    %v679 = vunpack.c.l.b16 %v608
    %v680 = vunpack.c.l.b16 %v609
    %v681 = vunpack.c.l.b16 %v610
    %v682 = vunpack.c.l.b16 %v611
    %v683 = vunpack.c.l.b16 %v612
    %v684 = vunpack.c.l.b16 %v613
    %v685 = vunpack.c.l.b16 %v614
    %v686 = vunpack.c.l.b16 %v615
    %v687 = vunpack.c.l.b16 %v616
    %v688 = vunpack.c.l.b16 %v617
    %v689 = vunpack.c.l.b16 %v618
    %v690 = vunpack.c.l.b16 %v619
    %v691 = vunpack.c.l.b16 %v620
    %v692 = vunpack.c.l.b16 %v621
    %v693 = vunpack.c.l.b16 %v622
    %v694 = vunpack.c.l.b16 %v623
    %v695 = vunpack.c.l.b16 %v624
    %v696 = vunpack.c.l.b16 %v625
    %v697 = vunpack.c.l.b16 %v626
    %v698 = vunpack.c.l.b16 %v627
    %v699 = vunpack.c.l.b16 %v628
    %v700 = vpack.c.b16 %v669, %v668
    %v701 = vpack.c.b16 %v671, %v670
    %v702 = vpack.c.b16 %v673, %v672
    %v703 = vpack.c.b16 %v675, %v674
    %v704 = vpack.c.b16 %v677, %v676
    %v705 = vpack.c.b16 %v679, %v678
    %v706 = vpack.c.b16 %v681, %v680
    %v707 = vpack.c.b16 %v683, %v682
    %v708 = vpack.c.b16 %v685, %v684
    %v709 = vpack.c.b16 %v687, %v686
    %v710 = vpack.c.b16 %v689, %v688
    %v711 = vpack.c.b16 %v691, %v690
    %v712 = vpack.c.b16 %v693, %v692
    %v713 = vpack.c.b16 %v695, %v694
    %v714 = vpack.c.b16 %v697, %v696
    %v715 = vpack.c.b16 %v699, %v698
    %732 = vmatprep.subr.bf16.mxu0 0
    %733 = vmatpush1.bf16.msra.mxu0 %v707
    %734 = vmatprep.subr.bf16.mxu0 0
    %735 = vmatpush1.bf16.msra.mxu0 %v706
    %736 = vmatprep.subr.bf16.mxu0 0
    %737 = vmatpush1.bf16.msra.mxu0 %v705
    %738 = vmatprep.subr.bf16.mxu0 0
    %739 = vmatpush1.bf16.msra.mxu0 %v704
    %740 = vmatprep.subr.bf16.mxu0 0
    %741 = vmatpush1.bf16.msra.mxu0 %v703
    %742 = vmatprep.subr.bf16.mxu0 0
    %743 = vmatpush1.bf16.msra.mxu0 %v702
    %744 = vmatprep.subr.bf16.mxu0 0
    %745 = vmatpush1.bf16.msra.mxu0 %v701
    %746 = vmatprep.subr.bf16.mxu0 0
    %747 = vmatpush1.bf16.msra.mxu0 %v700
    %748 = vmatprep.subr.bf16.mxu0 0
    %749 = vmatpush2.bf16.msra.mxu0 %v715
    %750 = vmatprep.subr.bf16.mxu0 0
    %751 = vmatpush2.bf16.msra.mxu0 %v714
    %752 = vmatprep.subr.bf16.mxu0 0
    %753 = vmatpush2.bf16.msra.mxu0 %v713
    %754 = vmatprep.subr.bf16.mxu0 0
    %755 = vmatpush2.bf16.msra.mxu0 %v712
    %756 = vmatprep.subr.bf16.mxu0 0
    %757 = vmatpush2.bf16.msra.mxu0 %v711
    %758 = vmatprep.subr.bf16.mxu0 0
    %759 = vmatpush2.bf16.msra.mxu0 %v710
    %760 = vmatprep.subr.bf16.mxu0 0
    %761 = vmatpush2.bf16.msra.mxu0 %v709
    %762 = vmatprep.subr.bf16.mxu0 0
    %763 = vmatpush2.bf16.msra.mxu0 %v708
    %764 = vmatprep.mubr.bf16.mxu0 %v596
    %765 = vmatmul.mubr.bf16.gmra.mxu0 %v595
    %v766 = vpop.f32.mrf.mxu0
    %v767 = vadd.f32 %v634, %v766
    %v768 = vpop.f32.mrf.mxu0
    %v769 = vpop.f32.mrf.mxu0
    %v770 = vpop.f32.mrf.mxu0
    %771 = vdwg.mxu0
    %772 = vst [vmem:[#allocation10] sm:$0xff] %v767
    // Predicated region
    $region46: #{tpu_custom_call.1} parent=1 // pred_check
      _
    $region47: #{tpu_custom_call.1} parent=1 // pred_check_branch
      %774 = sbr.rel (0) target = $region49
    $region48: #{tpu_custom_call.1} parent=1 // pred_region
      %s776 = ssub.s32 128, 128
      %777 = vsyncadd [#allocation4], %s776
      %s779 = sshll.u32 [#allocation10], 4
      %s780 = int_to_ptr.vmem [resolvable:$true] %s779
      %782 = dma.vmem_to_hbm [thread:$0]  %s780, 128, %s7, [#allocation4]
    $region49: #{tpu_custom_call.1} parent=1 // pred_fallthru
      _
    // Predicated region
    $region50: #{tpu_custom_call.1} parent=1 // pred_check
      _
    $region51: #{tpu_custom_call.1} parent=1 // pred_check_branch
      %784 = sbr.rel (0) target = $region53
    $region52: #{tpu_custom_call.1} parent=1 // pred_region
      %785 = dma.done [#allocation4], 128
    $region53: #{tpu_custom_call.1} parent=1 // pred_fallthru
      _
    %786 = vsyncpa [#allocation3], 1
    %787 = vsyncpa [#allocation6], 1
    %788 = vsyncpa [#allocation9], 1
    %789 = vsyncpa [#allocation4], 1

</llo_original>
